<compile_context>
chip_gen: v6e
topology: v6e:2x2x1
jax: 0.10.0
libtpu: 0.0.40
codegen_flags: <defaults>
</compile_context>

<pallas_src>
import functools

import jax
import jax.numpy as jnp
from jax.experimental import pallas as pl
from jax.experimental.pallas import tpu as pltpu


def _round_up(x, m):
    return (x + m - 1) // m * m


def _tpu_generation():
    """Best-effort TPU generation (5/6/7). Falls back to 6."""
    try:
        kind = jax.devices()[0].device_kind.lower()
        for g in (7, 6, 5, 4):
            if f"v{g}" in kind:
                return g
    except Exception:
        pass
    return 6


def _vmem_capacity_bytes():
    try:
        cap = getattr(pltpu.get_tpu_info(), "vmem_capacity_bytes", None)
        if cap:
            return int(cap)
    except Exception:
        pass
    return 64 * 2**20 if _tpu_generation() >= 7 else 128 * 2**20


def _default_tiles_and_vmem():
    """(token_tile, hidden_tile_cap, vmem_limit_bytes) per generation."""
    if _vmem_capacity_bytes() <= 64 * 2**20:
        # v7x-class: 64 MiB VMEM per TC -> smaller weight slabs, ~56 MiB cap.
        return 512, 1408, 56 * 2**20
    # v5e / v6e: 128 MiB VMEM -> big weight slabs, ~100 MiB scoped limit.
    return 512, 2048, 100 * 2**20


def _pick_hidden_tile(H, cap):
    """Largest divisor of H <= cap, preferring lane-aligned (x128) tiles."""
    cap = max(1, min(cap, H))
    aligned = [d for d in range(1, cap + 1) if H % d == 0 and d % 128 == 0]
    if aligned:
        return aligned[-1]
    return [d for d in range(1, cap + 1) if H % d == 0][-1]


def _ffn_kernel(x_ref, wg_ref, wu_ref, wd_ref, o_ref, acc_ref, *,
                th, chunk, ew_dtype):
    # x_ref:   (TM, E)      token tile (resident across the hidden axis)
    # wg_ref:  (E, TH)      gate_proj weight tile (hidden-tile h)
    # wu_ref:  (E, TH)      up_proj   weight tile (hidden-tile h)
    # wd_ref:  (TH, E)      down_proj weight tile (hidden-tile h)
    # o_ref:   (TM, E)
    # acc_ref: (TM, E) f32  accumulator across the hidden (reduction) axis
    h = pl.program_id(1)

    @pl.when(h == 0)
    def _():
        acc_ref[...] = jnp.zeros_like(acc_ref)

    x = x_ref[...]

    # Chunk the hidden tile so the MXU (matmuls) and VPU/EUP (SiLU * up)
    # interleave and the f32 intermediates stay chunk-sized.  Static Python
    # loop -> all ref slices are static, tile-aligned views.
    lo = 0
    while lo < th:
        c = min(chunk, th - lo)
        gate = jnp.dot(x, wg_ref[:, lo:lo + c], preferred_element_type=jnp.float32)
        up = jnp.dot(x, wu_ref[:, lo:lo + c], preferred_element_type=jnp.float32)
        gate = gate.astype(ew_dtype)
        up = up.astype(ew_dtype)
        hidden = (gate * jax.nn.sigmoid(gate)) * up
        acc_ref[...] += jnp.dot(hidden.astype(wd_ref.dtype),
                                wd_ref[lo:lo + c, :],
                                preferred_element_type=jnp.float32)
        lo += c

    @pl.when(h == pl.num_programs(1) - 1)
    def _():
        o_ref[...] = acc_ref[...].astype(o_ref.dtype)


def feed_forward(x, w_gate, w_up, w_down, *, token_tile=None, hidden_tile=None,
                 vmem_limit_bytes=None, ew_chunk=512):
    """SwiGLU FFN. x: (B, S, E); weights in (in, out) layout (= PyTorch W.T)."""
    B, S, E = x.shape
    E2, H = w_gate.shape
    assert E2 == E and w_up.shape == (E, H) and w_down.shape == (H, E)

    tm_def, th_cap_def, vmem_def = _default_tiles_and_vmem()
    token_tile = token_tile or tm_def
    hidden_tile = hidden_tile or th_cap_def
    vmem_limit_bytes = vmem_limit_bytes or vmem_def

    T = B * S
    x2d = x.reshape(T, E)

    # Token tile: large for MXU occupancy / weight-stream amortization, but
    # never bigger than the (padded) token count.
    # TODO(synk): for single-token-tile decode shapes on v7x, one of the two
    # TensorCores idles; a decode-specialized split of the hidden axis across
    # cores would recover it.
    tm = min(token_tile, _round_up(T, 8))
    T_pad = _round_up(T, tm)
    if T_pad != T:
        x2d = jnp.pad(x2d, ((0, T_pad - T), (0, 0)))
    n_t = T_pad // tm

    # Hidden tile: largest divisor of H within the generation's VMEM budget.
    th = _pick_hidden_tile(H, hidden_tile)
    n_h = H // th

    # bf16 elementwise only where the VPU/EUP have a bf16 path (v6e/v7x).
    ew_dtype = (jnp.bfloat16
                if (x.dtype == jnp.bfloat16 and _tpu_generation() >= 6)
                else jnp.float32)

    x_item = jnp.dtype(x.dtype).itemsize
    w_item = jnp.dtype(w_gate.dtype).itemsize
    cost = pl.CostEstimate(
        flops=6 * T_pad * E * H,                 # gate + up + down matmuls
        transcendentals=T_pad * H,               # sigmoid in SiLU
        bytes_accessed=(2 * T_pad * E * x_item   # x in, out
                        + n_t * 3 * E * H * w_item),  # weights re-streamed per token tile
    )

    out2d = pl.pallas_call(
        functools.partial(_ffn_kernel, th=th, chunk=ew_chunk, ew_dtype=ew_dtype),
        out_shape=jax.ShapeDtypeStruct((T_pad, E), x.dtype),
        grid_spec=pltpu.PrefetchScalarGridSpec(
            num_scalar_prefetch=0,
            grid=(n_t, n_h),                     # tokens parallel, hidden reduction last
            in_specs=[
                pl.BlockSpec((tm, E), lambda i, h: (i, 0)),   # x tile
                pl.BlockSpec((E, th), lambda i, h: (0, h)),   # gate W tile
                pl.BlockSpec((E, th), lambda i, h: (0, h)),   # up W tile
                pl.BlockSpec((th, E), lambda i, h: (h, 0)),   # down W tile
            ],
            out_specs=pl.BlockSpec((tm, E), lambda i, h: (i, 0)),
            scratch_shapes=[pltpu.VMEM((tm, E), jnp.float32)],
        ),
        compiler_params=pltpu.CompilerParams(
            dimension_semantics=("parallel", "arbitrary"),
            vmem_limit_bytes=vmem_limit_bytes,
        ),
        cost_estimate=cost,
    )(x2d, w_gate, w_up, w_down)

    return out2d[:T].reshape(B, S, E)


def reference_ffn(x, w_gate, w_up, w_down):
    g = x @ w_gate
    u = x @ w_up
    return (jax.nn.silu(g) * u) @ w_down


if __name__ == "__main__":
    key = jax.random.PRNGKey(0)

    # --- Small config matching the module: n_embd=32, hidden_dim=64 ---
    B, S, E, H = 2, 8, 32, 64
    kx, kg, ku, kd, k2 = jax.random.split(key, 5)
    x = jax.random.normal(kx, (B, S, E), dtype=jnp.float32)
    w_gate = jax.random.normal(kg, (E, H), dtype=jnp.float32) * 0.05
    w_up = jax.random.normal(ku, (E, H), dtype=jnp.float32) * 0.05
    w_down = jax.random.normal(kd, (H, E), dtype=jnp.float32) * 0.05

    out = jax.block_until_ready(feed_forward(x, w_gate, w_up, w_down))
    ref = reference_ffn(x, w_gate, w_up, w_down)
    assert out.shape == (B, S, E)
    assert jnp.allclose(out, ref, atol=1e-4, rtol=1e-4), "mismatch vs reference (small)"

    # --- Second config exercising multiple hidden tiles + chunked elementwise ---
    B2, S2, E2, H2 = 1, 64, 128, 512
    ka, kb, kc, ke = jax.random.split(k2, 4)
    x2 = jax.random.normal(ka, (B2, S2, E2), dtype=jnp.float32)
    wg2 = jax.random.normal(kb, (E2, H2), dtype=jnp.float32) * 0.05
    wu2 = jax.random.normal(kc, (E2, H2), dtype=jnp.float32) * 0.05
    wd2 = jax.random.normal(ke, (H2, E2), dtype=jnp.float32) * 0.05

    out2 = jax.block_until_ready(
        feed_forward(x2, wg2, wu2, wd2, hidden_tile=256, ew_chunk=128))
    ref2 = reference_ffn(x2, wg2, wu2, wd2)
    assert jnp.allclose(out2, ref2, atol=1e-3, rtol=1e-3), "mismatch vs reference (tiled)"

    print("KERNEL_OK")
</pallas_src>

<mosaic_0001>
module attributes {stable_mosaic.version = 11 : i64} {
  func.func @_ffn_kernel(%arg0: i32, %arg1: i32, %arg2: memref<16x32xf32, #tpu.memory_space<vmem>>, %arg3: memref<32x64xf32, #tpu.memory_space<vmem>>, %arg4: memref<32x64xf32, #tpu.memory_space<vmem>>, %arg5: memref<64x32xf32, #tpu.memory_space<vmem>>, %arg6: memref<16x32xf32, #tpu.memory_space<vmem>>, %arg7: memref<16x32xf32, #tpu.memory_space<vmem>>) attributes {dimension_semantics = [#tpu.dimension_semantics<parallel>, #tpu.dimension_semantics<arbitrary>], iteration_bounds = array<i64: 1, 1>, scalar_prefetch = 0 : i64, scratch_operands = 1 : i64, tpu.core_type = #tpu.core_type<tc>, window_params = [{transform_indices = @transform_0, window_bounds = array<i64: 16, 32>}, {transform_indices = @transform_1, window_bounds = array<i64: 32, 64>}, {transform_indices = @transform_2, window_bounds = array<i64: 32, 64>}, {transform_indices = @transform_3, window_bounds = array<i64: 64, 32>}, {transform_indices = @transform_4, window_bounds = array<i64: 16, 32>}]} {
    %c0_i32 = arith.constant 0 : i32
    %0 = arith.cmpi eq, %arg1, %c0_i32 : i32
    %1 = arith.extui %0 : i1 to i32
    %c0_i32_0 = arith.constant 0 : i32
    %2 = arith.cmpi ne, %1, %c0_i32_0 : i32
    scf.if %2 {
      %cst_17 = arith.constant 0.000000e+00 : f32
      %23 = vector.broadcast %cst_17 : f32 to vector<16x32xf32>
      %c0_18 = arith.constant 0 : index
      %c0_19 = arith.constant 0 : index
      %24 = vector.load %arg7[%c0_18, %c0_19] : memref<16x32xf32, #tpu.memory_space<vmem>>, vector<16x32xf32>
      tpu.vector_store %arg7[%c0_18, %c0_19], %23 {strides = array<i32>} : memref<16x32xf32, #tpu.memory_space<vmem>>, vector<16x32xf32>,
    } else {
    }
    %c0 = arith.constant 0 : index
    %c0_1 = arith.constant 0 : index
    %3 = vector.load %arg2[%c0, %c0_1] : memref<16x32xf32, #tpu.memory_space<vmem>>, vector<16x32xf32>
    %c0_2 = arith.constant 0 : index
    %c0_3 = arith.constant 0 : index
    %4 = vector.load %arg3[%c0_2, %c0_3] : memref<32x64xf32, #tpu.memory_space<vmem>>, vector<32x64xf32>
    %cst = arith.constant dense<0.000000e+00> : vector<16x64xf32>
    %5 = tpu.matmul %3, %4, %cst {dimension_numbers = #tpu.dot_dimension_numbers<[1], [0], [0], [1], [0, 0, 1, 1], [], []>} : vector<16x32xf32>, vector<32x64xf32>, vector<16x64xf32> -> vector<16x64xf32>
    %c0_4 = arith.constant 0 : index
    %c0_5 = arith.constant 0 : index
    %6 = vector.load %arg4[%c0_4, %c0_5] : memref<32x64xf32, #tpu.memory_space<vmem>>, vector<32x64xf32>
    %cst_6 = arith.constant dense<0.000000e+00> : vector<16x64xf32>
    %7 = tpu.matmul %3, %6, %cst_6 {dimension_numbers = #tpu.dot_dimension_numbers<[1], [0], [0], [1], [0, 0, 1, 1], [], []>} : vector<16x32xf32>, vector<32x64xf32>, vector<16x64xf32> -> vector<16x64xf32>
    %8 = arith.negf %5 : vector<16x64xf32>
    %9 = math.exp %8 : vector<16x64xf32>
    %cst_7 = arith.constant 1.000000e+00 : f32
    %10 = vector.broadcast %cst_7 : f32 to vector<16x64xf32>
    %11 = arith.addf %10, %9 : vector<16x64xf32>
    %12 = arith.divf %10, %11 : vector<16x64xf32>
    %13 = arith.mulf %5, %12 : vector<16x64xf32>
    %14 = arith.mulf %13, %7 : vector<16x64xf32>
    %c0_8 = arith.constant 0 : index
    %c0_9 = arith.constant 0 : index
    %15 = vector.load %arg7[%c0_8, %c0_9] : memref<16x32xf32, #tpu.memory_space<vmem>>, vector<16x32xf32>
    %c0_10 = arith.constant 0 : index
    %c0_11 = arith.constant 0 : index
    %16 = vector.load %arg5[%c0_10, %c0_11] : memref<64x32xf32, #tpu.memory_space<vmem>>, vector<64x32xf32>
    %cst_12 = arith.constant dense<0.000000e+00> : vector<16x32xf32>
    %17 = tpu.matmul %14, %16, %cst_12 {dimension_numbers = #tpu.dot_dimension_numbers<[1], [0], [0], [1], [0, 0, 1, 1], [], []>} : vector<16x64xf32>, vector<64x32xf32>, vector<16x32xf32> -> vector<16x32xf32>
    %18 = arith.addf %15, %17 : vector<16x32xf32>
    %c0_13 = arith.constant 0 : index
    %c0_14 = arith.constant 0 : index
    %19 = vector.load %arg7[%c0_13, %c0_14] : memref<16x32xf32, #tpu.memory_space<vmem>>, vector<16x32xf32>
    tpu.vector_store %arg7[%c0_13, %c0_14], %18 {strides = array<i32>} : memref<16x32xf32, #tpu.memory_space<vmem>>, vector<16x32xf32>,
    %c0_i32_15 = arith.constant 0 : i32
    %20 = arith.cmpi eq, %arg1, %c0_i32_15 : i32
    %21 = arith.extui %20 : i1 to i32
    %c0_i32_16 = arith.constant 0 : i32
    %22 = arith.cmpi ne, %21, %c0_i32_16 : i32
    scf.if %22 {
      %c0_17 = arith.constant 0 : index
      %c0_18 = arith.constant 0 : index
      %23 = vector.load %arg7[%c0_17, %c0_18] : memref<16x32xf32, #tpu.memory_space<vmem>>, vector<16x32xf32>
      %c0_19 = arith.constant 0 : index
      %c0_20 = arith.constant 0 : index
      %24 = vector.load %arg6[%c0_19, %c0_20] : memref<16x32xf32, #tpu.memory_space<vmem>>, vector<16x32xf32>
      tpu.vector_store %arg6[%c0_19, %c0_20], %23 {strides = array<i32>} : memref<16x32xf32, #tpu.memory_space<vmem>>, vector<16x32xf32>,
    } else {
    }
    return
  }
  func.func @transform_0(%arg0: i32, %arg1: i32) -> (i32, i32) {
    %c0_i32 = arith.constant 0 : i32
    %c0_i32_0 = arith.constant 0 : i32
    return %arg0, %c0_i32 : i32, i32
  }
  func.func @transform_1(%arg0: i32, %arg1: i32) -> (i32, i32) {
    %c0_i32 = arith.constant 0 : i32
    %c0_i32_0 = arith.constant 0 : i32
    return %c0_i32, %arg1 : i32, i32
  }
  func.func @transform_2(%arg0: i32, %arg1: i32) -> (i32, i32) {
    %c0_i32 = arith.constant 0 : i32
    %c0_i32_0 = arith.constant 0 : i32
    return %c0_i32, %arg1 : i32, i32
  }
  func.func @transform_3(%arg0: i32, %arg1: i32) -> (i32, i32) {
    %c0_i32 = arith.constant 0 : i32
    %c0_i32_0 = arith.constant 0 : i32
    return %arg1, %c0_i32 : i32, i32
  }
  func.func @transform_4(%arg0: i32, %arg1: i32) -> (i32, i32) {
    %c0_i32 = arith.constant 0 : i32
    %c0_i32_0 = arith.constant 0 : i32
    return %arg0, %c0_i32 : i32, i32
  }
}

</mosaic_0001>

<llo_original>
// kernel: tpu_custom_call.1
$region0: #{tpu_custom_call.1}
  #allocation0 [shape = 'u32[]', space=smem, size = 0x4, offset = 0x4, fixed_abs, tag = 'smem constant byte address 0x4 - core index']
  #allocation1 [shape = 'u32[144,128]{1,0:T(1,128)}', space=vmem, size = 0x12000, scoped, tag = 'internal scratch']
  #allocation2 [shape = 'f32[16,32]{1,0:T(8,128)}', space=vmem, size = 0x2000, scoped, tag = 'scratch operand']
  %s0 = inlined_call_operand.vmem [shape: f32[16,32], index: 0, kind: input, shape index: {}]
  %s1 = inlined_call_operand.vmem [shape: f32[32,64], index: 1, kind: input, shape index: {}]
  %s2 = inlined_call_operand.vmem [shape: f32[32,64], index: 2, kind: input, shape index: {}]
  %s3 = inlined_call_operand.vmem [shape: f32[64,32], index: 3, kind: input, shape index: {}]
  %s4 = inlined_call_operand.hbm [shape: f32[16,32], index: 4, kind: output, shape index: {}]
  %s5 = sld [smem:[#allocation0]]
  $region34: #{tpu_custom_call.1} parent=0
    _
  %s7 = ssub.s32 1, %s5
  %s8 = scalar_select 0, %s7, %s5
  $region1: #{tpu_custom_call.1} parent=0
    #allocation3 [shape = 'u8[8192]{0}', space=vmem, size = 0x2000, scoped, tag = 'output window, operand 0, single buffered']
    #allocation4 [shape = 's32[1]{0}', space=sflag, size = 0x4, scoped, tag = 'scoped memory for tpu_custom_call.1']
    %9 = vsyncpa [#allocation4], 0
    // Predicated region
    $region2: #{tpu_custom_call.1} parent=1 // pred_check
      _
    $region3: #{tpu_custom_call.1} parent=1 // pred_check_branch
      %11 = sbr.rel (0) target = $region5
    $region4: #{tpu_custom_call.1} parent=1 // pred_region
      _
    $region5: #{tpu_custom_call.1} parent=1 // pred_fallthru
      _
    // Predicated region
    $region6: #{tpu_custom_call.1} parent=1 // pred_check
      _
    $region7: #{tpu_custom_call.1} parent=1 // pred_check_branch
      %13 = sbr.rel (0) target = $region9
    $region8: #{tpu_custom_call.1} parent=1 // pred_region
      _
    $region9: #{tpu_custom_call.1} parent=1 // pred_fallthru
      _
    // Predicated region
    $region10: #{tpu_custom_call.1} parent=1 // pred_check
      _
    $region11: #{tpu_custom_call.1} parent=1 // pred_check_branch
      %15 = sbr.rel (0) target = $region13
    $region12: #{tpu_custom_call.1} parent=1 // pred_region
      _
    $region13: #{tpu_custom_call.1} parent=1 // pred_fallthru
      _
    // Predicated region
    $region14: #{tpu_custom_call.1} parent=1 // pred_check
      _
    $region15: #{tpu_custom_call.1} parent=1 // pred_check_branch
      %17 = sbr.rel (0) target = $region17
    $region16: #{tpu_custom_call.1} parent=1 // pred_region
      _
    $region17: #{tpu_custom_call.1} parent=1 // pred_fallthru
      _
    %p18 = scmp.eq.s32.totalorder 0, 0
    // Predicated region
    $region18: #{tpu_custom_call.1} parent=1 // pred_check
      %p19 = pneg %p18
    $region19: #{tpu_custom_call.1} parent=1 // pred_check_branch
      %21 = sbr.rel (%p19) target = $region21
    $region20: #{tpu_custom_call.1} parent=1 // pred_region
      %vm22 = vcmask 261120
      %23 = vst.msk [vmem:[#allocation2] sm:$0xff] %vm22, 0.0
      %24 = vst.msk [vmem:[#allocation2 + $0x8] sm:$0xff] %vm22, 0.0
    $region21: #{tpu_custom_call.1} parent=1 // pred_fallthru
      _
    %v25 = vld [vmem:[%s0] sm:$0xff]
    %v26 = vld [vmem:[%s0 + $0x8] sm:$0xff]
    %v27 = vld [vmem:[%s1] sm:$0xff]
    %v28 = vld [vmem:[%s1 + $0x8] sm:$0xff]
    %v29 = vld [vmem:[%s1 + $0x10] sm:$0xff]
    %v30 = vld [vmem:[%s1 + $0x18] sm:$0xff]
    %vm31 = vcmask 261120
    %v33 = vsel %vm31, %v25, 0
    %v36 = vsel %vm31, %v26, 0
    %38 = vmatprep.subr.mxu0 0.0
    %39 = vmatpush1.msra.mxu0 0.0
    %40 = vmatprep.subr.mxu0 0.0
    %41 = vmatpush1.msra.mxu0 0.0
    %42 = vmatprep.subr.mxu0 0.0
    %43 = vmatpush1.msra.mxu0 0.0
    %44 = vmatprep.subr.mxu0 0.0
    %45 = vmatpush1.msra.mxu0 0.0
    %46 = vmatprep.subr.mxu0 0.0
    %47 = vmatpush1.msra.mxu0 0.0
    %48 = vmatprep.subr.mxu0 0.0
    %49 = vmatpush1.msra.mxu0 0.0
    %50 = vmatprep.subr.mxu0 0.0
    %51 = vmatpush1.msra.mxu0 0.0
    %52 = vmatprep.subr.mxu0 0.0
    %53 = vmatpush1.msra.mxu0 0.0
    %54 = vmatprep.subr.mxu0 0.0
    %55 = vmatpush1.msra.mxu0 0.0
    %56 = vmatprep.subr.mxu0 0.0
    %57 = vmatpush1.msra.mxu0 0.0
    %58 = vmatprep.subr.mxu0 0.0
    %59 = vmatpush1.msra.mxu0 0.0
    %60 = vmatprep.subr.mxu0 0.0
    %61 = vmatpush1.msra.mxu0 0.0
    %62 = vmatprep.subr.mxu0 0.0
    %63 = vmatpush1.msra.mxu0 %v30
    %64 = vmatprep.subr.mxu0 0.0
    %65 = vmatpush1.msra.mxu0 %v29
    %66 = vmatprep.subr.mxu0 0.0
    %67 = vmatpush1.msra.mxu0 %v28
    %68 = vmatprep.subr.mxu0 0.0
    %69 = vmatpush1.msra.mxu0 %v27
    %70 = vmatprep.subr.mxu0 0.0
    %71 = vmatpush2.msra.mxu0 0.0
    %72 = vmatprep.subr.mxu0 0.0
    %73 = vmatpush2.msra.mxu0 0.0
    %74 = vmatprep.subr.mxu0 0.0
    %75 = vmatpush2.msra.mxu0 0.0
    %76 = vmatprep.subr.mxu0 0.0
    %77 = vmatpush2.msra.mxu0 0.0
    %78 = vmatprep.subr.mxu0 0.0
    %79 = vmatpush2.msra.mxu0 0.0
    %80 = vmatprep.subr.mxu0 0.0
    %81 = vmatpush2.msra.mxu0 0.0
    %82 = vmatprep.subr.mxu0 0.0
    %83 = vmatpush2.msra.mxu0 0.0
    %84 = vmatprep.subr.mxu0 0.0
    %85 = vmatpush2.msra.mxu0 0.0
    %86 = vmatprep.subr.mxu0 0.0
    %87 = vmatpush2.msra.mxu0 0.0
    %88 = vmatprep.subr.mxu0 0.0
    %89 = vmatpush2.msra.mxu0 0.0
    %90 = vmatprep.subr.mxu0 0.0
    %91 = vmatpush2.msra.mxu0 0.0
    %92 = vmatprep.subr.mxu0 0.0
    %93 = vmatpush2.msra.mxu0 0.0
    %94 = vmatprep.subr.mxu0 0.0
    %95 = vmatpush2.msra.mxu0 0.0
    %96 = vmatprep.subr.mxu0 0.0
    %97 = vmatpush2.msra.mxu0 0.0
    %98 = vmatprep.subr.mxu0 0.0
    %99 = vmatpush2.msra.mxu0 0.0
    %100 = vmatprep.subr.mxu0 0.0
    %101 = vmatpush2.msra.mxu0 0.0
    %102 = vmatprep.mubr.f32.mxu0 0.0
    %103 = vmatmul.mubr.f32.gmra.mxu0 %v33
    %v104 = vpop.f32.mrf.mxu0
    %v105 = vadd.f32 0.0, %v104
    %v106 = vpop.f32.mrf.mxu0
    %107 = vmatprep.mubr.f32.mxu0 0.0
    %108 = vmatmul.mubr.f32.gmra.mxu0 %v36
    %v109 = vpop.f32.mrf.mxu0
    %v110 = vadd.f32 0.0, %v109
    %v111 = vpop.f32.mrf.mxu0
    %112 = vdwg.mxu0
    %v113 = vld [vmem:[%s2] sm:$0xff]
    %v114 = vld [vmem:[%s2 + $0x8] sm:$0xff]
    %v115 = vld [vmem:[%s2 + $0x10] sm:$0xff]
    %v116 = vld [vmem:[%s2 + $0x18] sm:$0xff]
    %117 = vmatprep.subr.mxu0 0.0
    %118 = vmatpush1.msra.mxu0 0.0
    %119 = vmatprep.subr.mxu0 0.0
    %120 = vmatpush1.msra.mxu0 0.0
    %121 = vmatprep.subr.mxu0 0.0
    %122 = vmatpush1.msra.mxu0 0.0
    %123 = vmatprep.subr.mxu0 0.0
    %124 = vmatpush1.msra.mxu0 0.0
    %125 = vmatprep.subr.mxu0 0.0
    %126 = vmatpush1.msra.mxu0 0.0
    %127 = vmatprep.subr.mxu0 0.0
    %128 = vmatpush1.msra.mxu0 0.0
    %129 = vmatprep.subr.mxu0 0.0
    %130 = vmatpush1.msra.mxu0 0.0
    %131 = vmatprep.subr.mxu0 0.0
    %132 = vmatpush1.msra.mxu0 0.0
    %133 = vmatprep.subr.mxu0 0.0
    %134 = vmatpush1.msra.mxu0 0.0
    %135 = vmatprep.subr.mxu0 0.0
    %136 = vmatpush1.msra.mxu0 0.0
    %137 = vmatprep.subr.mxu0 0.0
    %138 = vmatpush1.msra.mxu0 0.0
    %139 = vmatprep.subr.mxu0 0.0
    %140 = vmatpush1.msra.mxu0 0.0
    %141 = vmatprep.subr.mxu0 0.0
    %142 = vmatpush1.msra.mxu0 %v116
    %143 = vmatprep.subr.mxu0 0.0
    %144 = vmatpush1.msra.mxu0 %v115
    %145 = vmatprep.subr.mxu0 0.0
    %146 = vmatpush1.msra.mxu0 %v114
    %147 = vmatprep.subr.mxu0 0.0
    %148 = vmatpush1.msra.mxu0 %v113
    %149 = vmatprep.subr.mxu0 0.0
    %150 = vmatpush2.msra.mxu0 0.0
    %151 = vmatprep.subr.mxu0 0.0
    %152 = vmatpush2.msra.mxu0 0.0
    %153 = vmatprep.subr.mxu0 0.0
    %154 = vmatpush2.msra.mxu0 0.0
    %155 = vmatprep.subr.mxu0 0.0
    %156 = vmatpush2.msra.mxu0 0.0
    %157 = vmatprep.subr.mxu0 0.0
    %158 = vmatpush2.msra.mxu0 0.0
    %159 = vmatprep.subr.mxu0 0.0
    %160 = vmatpush2.msra.mxu0 0.0
    %161 = vmatprep.subr.mxu0 0.0
    %162 = vmatpush2.msra.mxu0 0.0
    %163 = vmatprep.subr.mxu0 0.0
    %164 = vmatpush2.msra.mxu0 0.0
    %165 = vmatprep.subr.mxu0 0.0
    %166 = vmatpush2.msra.mxu0 0.0
    %167 = vmatprep.subr.mxu0 0.0
    %168 = vmatpush2.msra.mxu0 0.0
    %169 = vmatprep.subr.mxu0 0.0
    %170 = vmatpush2.msra.mxu0 0.0
    %171 = vmatprep.subr.mxu0 0.0
    %172 = vmatpush2.msra.mxu0 0.0
    %173 = vmatprep.subr.mxu0 0.0
    %174 = vmatpush2.msra.mxu0 0.0
    %175 = vmatprep.subr.mxu0 0.0
    %176 = vmatpush2.msra.mxu0 0.0
    %177 = vmatprep.subr.mxu0 0.0
    %178 = vmatpush2.msra.mxu0 0.0
    %179 = vmatprep.subr.mxu0 0.0
    %180 = vmatpush2.msra.mxu0 0.0
    %181 = vmatprep.mubr.f32.mxu0 0.0
    %182 = vmatmul.mubr.f32.gmra.mxu0 %v33
    %v183 = vpop.f32.mrf.mxu0
    %v184 = vadd.f32 0.0, %v183
    %v185 = vpop.f32.mrf.mxu0
    %186 = vmatprep.mubr.f32.mxu0 0.0
    %187 = vmatmul.mubr.f32.gmra.mxu0 %v36
    %v188 = vpop.f32.mrf.mxu0
    %v189 = vadd.f32 0.0, %v188
    %v190 = vpop.f32.mrf.mxu0
    %191 = vdwg.mxu0
    %v192 = vxor.u32 %v105, 2147483648
    %v193 = vxor.u32 %v110, 2147483648
    %v194 = vmul.f32 %v192, 1.442695
    %v195 = vpow.pop %v194
    %v196 = vmul.f32 %v193, 1.442695
    %v197 = vpow.pop %v196
    %v198 = vadd.f32 %v195, 1.0
    %v199 = vadd.f32 %v197, 1.0
    %v200 = vrcp.pop %v198
    %v201 = vmul.f32 1.0, %v200
    %v202 = vrcp.pop %v199
    %v203 = vmul.f32 1.0, %v202
    %v204 = vmul.f32 %v105, %v201
    %v205 = vmul.f32 %v110, %v203
    %v206 = vmul.f32 %v204, %v184
    %v207 = vmul.f32 %v205, %v189
    %v208 = vld [vmem:[#allocation2] sm:$0xff]
    %v209 = vld [vmem:[#allocation2 + $0x8] sm:$0xff]
    %v210 = vld [vmem:[%s3] sm:$0xff]
    %v211 = vld [vmem:[%s3 + $0x8] sm:$0xff]
    %v212 = vld [vmem:[%s3 + $0x10] sm:$0xff]
    %v213 = vld [vmem:[%s3 + $0x18] sm:$0xff]
    %v214 = vld [vmem:[%s3 + $0x20] sm:$0xff]
    %v215 = vld [vmem:[%s3 + $0x28] sm:$0xff]
    %v216 = vld [vmem:[%s3 + $0x30] sm:$0xff]
    %v217 = vld [vmem:[%s3 + $0x38] sm:$0xff]
    %vm218 = vcmask 523264
    %v220 = vsel %vm218, %v206, 0
    %v223 = vsel %vm218, %v207, 0
    %225 = vmatprep.subr.mxu0 0.0
    %226 = vmatpush1.msra.mxu0 0.0
    %227 = vmatprep.subr.mxu0 0.0
    %228 = vmatpush1.msra.mxu0 0.0
    %229 = vmatprep.subr.mxu0 0.0
    %230 = vmatpush1.msra.mxu0 0.0
    %231 = vmatprep.subr.mxu0 0.0
    %232 = vmatpush1.msra.mxu0 0.0
    %233 = vmatprep.subr.mxu0 0.0
    %234 = vmatpush1.msra.mxu0 0.0
    %235 = vmatprep.subr.mxu0 0.0
    %236 = vmatpush1.msra.mxu0 0.0
    %237 = vmatprep.subr.mxu0 0.0
    %238 = vmatpush1.msra.mxu0 0.0
    %239 = vmatprep.subr.mxu0 0.0
    %240 = vmatpush1.msra.mxu0 0.0
    %241 = vmatprep.subr.mxu0 0.0
    %242 = vmatpush1.msra.mxu0 %v217
    %243 = vmatprep.subr.mxu0 0.0
    %244 = vmatpush1.msra.mxu0 %v216
    %245 = vmatprep.subr.mxu0 0.0
    %246 = vmatpush1.msra.mxu0 %v215
    %247 = vmatprep.subr.mxu0 0.0
    %248 = vmatpush1.msra.mxu0 %v214
    %249 = vmatprep.subr.mxu0 0.0
    %250 = vmatpush1.msra.mxu0 %v213
    %251 = vmatprep.subr.mxu0 0.0
    %252 = vmatpush1.msra.mxu0 %v212
    %253 = vmatprep.subr.mxu0 0.0
    %254 = vmatpush1.msra.mxu0 %v211
    %255 = vmatprep.subr.mxu0 0.0
    %256 = vmatpush1.msra.mxu0 %v210
    %257 = vmatprep.subr.mxu0 0.0
    %258 = vmatpush2.msra.mxu0 0.0
    %259 = vmatprep.subr.mxu0 0.0
    %260 = vmatpush2.msra.mxu0 0.0
    %261 = vmatprep.subr.mxu0 0.0
    %262 = vmatpush2.msra.mxu0 0.0
    %263 = vmatprep.subr.mxu0 0.0
    %264 = vmatpush2.msra.mxu0 0.0
    %265 = vmatprep.subr.mxu0 0.0
    %266 = vmatpush2.msra.mxu0 0.0
    %267 = vmatprep.subr.mxu0 0.0
    %268 = vmatpush2.msra.mxu0 0.0
    %269 = vmatprep.subr.mxu0 0.0
    %270 = vmatpush2.msra.mxu0 0.0
    %271 = vmatprep.subr.mxu0 0.0
    %272 = vmatpush2.msra.mxu0 0.0
    %273 = vmatprep.subr.mxu0 0.0
    %274 = vmatpush2.msra.mxu0 0.0
    %275 = vmatprep.subr.mxu0 0.0
    %276 = vmatpush2.msra.mxu0 0.0
    %277 = vmatprep.subr.mxu0 0.0
    %278 = vmatpush2.msra.mxu0 0.0
    %279 = vmatprep.subr.mxu0 0.0
    %280 = vmatpush2.msra.mxu0 0.0
    %281 = vmatprep.subr.mxu0 0.0
    %282 = vmatpush2.msra.mxu0 0.0
    %283 = vmatprep.subr.mxu0 0.0
    %284 = vmatpush2.msra.mxu0 0.0
    %285 = vmatprep.subr.mxu0 0.0
    %286 = vmatpush2.msra.mxu0 0.0
    %287 = vmatprep.subr.mxu0 0.0
    %288 = vmatpush2.msra.mxu0 0.0
    %289 = vmatprep.mubr.f32.mxu0 0.0
    %290 = vmatmul.mubr.f32.gmra.mxu0 %v220
    %v291 = vpop.f32.mrf.mxu0
    %v292 = vadd.f32 0.0, %v291
    %v293 = vpop.f32.mrf.mxu0
    %294 = vmatprep.mubr.f32.mxu0 0.0
    %295 = vmatmul.mubr.f32.gmra.mxu0 %v223
    %v296 = vpop.f32.mrf.mxu0
    %v297 = vadd.f32 0.0, %v296
    %v298 = vpop.f32.mrf.mxu0
    %299 = vdwg.mxu0
    %v300 = vadd.f32 %v208, %v292
    %v301 = vadd.f32 %v209, %v297
    %302 = vst.msk [vmem:[#allocation2] sm:$0xff] %vm31, %v300
    %303 = vst.msk [vmem:[#allocation2 + $0x8] sm:$0xff] %vm31, %v301
    // Predicated region
    $region22: #{tpu_custom_call.1} parent=1 // pred_check
      %p304 = pneg %p18
    $region23: #{tpu_custom_call.1} parent=1 // pred_check_branch
      %306 = sbr.rel (%p304) target = $region25
    $region24: #{tpu_custom_call.1} parent=1 // pred_region
      %v307 = vld [vmem:[#allocation2] sm:$0xff]
      %v308 = vld [vmem:[#allocation2 + $0x8] sm:$0xff]
      %309 = vst.msk [vmem:[#allocation3] sm:$0xff] %vm31, %v307
      %310 = vst.msk [vmem:[#allocation3 + $0x8] sm:$0xff] %vm31, %v308
    $region25: #{tpu_custom_call.1} parent=1 // pred_fallthru
      _
    // Predicated region
    $region26: #{tpu_custom_call.1} parent=1 // pred_check
      _
    $region27: #{tpu_custom_call.1} parent=1 // pred_check_branch
      %312 = sbr.rel (0) target = $region29
    $region28: #{tpu_custom_call.1} parent=1 // pred_region
      %s314 = ssub.s32 256, 256
      %315 = vsyncadd [#allocation4], %s314
      %s316 = sshll.u32 [#allocation3], 4
      %s317 = int_to_ptr.vmem [resolvable:$true] %s316
      %322 = dma.vmem_to_hbm [thread:$0]  %s317, 256, %s4, [#allocation4], 128, 128, 8
    $region29: #{tpu_custom_call.1} parent=1 // pred_fallthru
      _
    // Predicated region
    $region30: #{tpu_custom_call.1} parent=1 // pred_check
      _
    $region31: #{tpu_custom_call.1} parent=1 // pred_check_branch
      %324 = sbr.rel (0) target = $region33
    $region32: #{tpu_custom_call.1} parent=1 // pred_region
      %325 = dma.done [#allocation4], 256
    $region33: #{tpu_custom_call.1} parent=1 // pred_fallthru
      _
    %326 = vsyncpa [#allocation4], 1

</llo_original>
